<compile_context>
chip_gen: v7x
topology: tpu7x:2x2x1
jax: 0.10.0
libtpu: 0.0.40
codegen_flags: <defaults>
</compile_context>

<pallas_src>
import jax
import jax.numpy as jnp
from jax.experimental import pallas as pl
from jax.experimental.pallas import tpu as pltpu


_VMEM_LIMIT_BYTES = 32 * 1024 * 1024
_NO_GRID_MAX_ROWS = 2048          # packed rows: ~4 MiB of x + hidden + out in VMEM
_TILE_CANDIDATES = (4096, 2048, 1024)   # packed rows per tile (0.5..2 MiB x/out tiles)


# -----------------------------------------------------------------------------
# Kernel body (shared by both call paths) -- operates on lane-dense packed data
# -----------------------------------------------------------------------------
def inception_kernel(x_ref, w1_ref, b1_ref, w2_ref, b2_ref, o_ref):
    # x_ref : (tp, d_in)      VMEM   d_in  = pack * n_in  (=128 for n_in=32)
    # w1_ref: (d_in, d_mid)   VMEM   d_mid = pack * n_mid (=256 for n_mid=64)
    # b1_ref: (1, d_mid)      VMEM
    # w2_ref: (d_mid, d_in)   VMEM
    # b2_ref: (1, d_in)       VMEM
    x = x_ref[...]

    # hidden = relu(x @ W1_bd + b1)  -- MXU matmul, f32 accumulation
    h = jnp.dot(x, w1_ref[...], preferred_element_type=jnp.float32)
    h = jnp.maximum(h + b1_ref[...], 0.0)

    # y = relu(h @ W2_bd + b2 + x)   -- residual add + final relu
    y = jnp.dot(h, w2_ref[...], preferred_element_type=jnp.float32)
    o_ref[...] = jnp.maximum(y + b2_ref[...] + x, 0.0).astype(o_ref.dtype)


# -----------------------------------------------------------------------------
# One-time parameter preparation (NOT in the per-call hot path)
# -----------------------------------------------------------------------------
def _pack_factor(n_in):
    """How many logical rows to pack into one 128-lane row."""
    if n_in >= 128 or 128 % n_in != 0:
        return 1
    return 128 // n_in


def prepare_inception_params(w1, b1, w2, b2):
    """torch nn.Linear layout in: w1 (n_mid,n_in), b1 (n_mid,), w2 (n_in,n_mid),
    b2 (n_in,).  Returns lane-dense block-diagonal weights / tiled biases,
    computed once."""
    n_mid, n_in = w1.shape
    pack = _pack_factor(n_in)
    eye = jnp.eye(pack, dtype=w1.dtype)
    w1_bd = jnp.kron(eye, jnp.transpose(w1))          # (pack*n_in, pack*n_mid)
    w2_bd = jnp.kron(eye, jnp.transpose(w2))          # (pack*n_mid, pack*n_in)
    b1_bd = jnp.tile(b1, pack).reshape(1, pack * n_mid)
    b2_bd = jnp.tile(b2, pack).reshape(1, pack * n_in)
    _batch_dim_semantics()   # warm the CORE_PARALLEL probe outside any jit trace
    return (w1_bd, b1_bd, w2_bd, b2_bd)


# -----------------------------------------------------------------------------
# Batch-axis dimension semantics: CORE_PARALLEL if supported, else PARALLEL
# -----------------------------------------------------------------------------
_BATCH_SEMANTICS_CACHE = []


def _probe_identity_kernel(x_ref, o_ref):
    o_ref[...] = x_ref[...]


def _batch_dim_semantics():
    """Prefer CORE_PARALLEL (explicitly shards the batch grid axis across both
    TensorCores on v7x); fall back to PARALLEL if this JAX/Mosaic/chip combo
    rejects it or miscompiles the probe."""
    if _BATCH_SEMANTICS_CACHE:
        return _BATCH_SEMANTICS_CACHE[0]
    sem = getattr(pltpu, "CORE_PARALLEL", None)
    chosen = pltpu.PARALLEL
    if sem is not None:
        try:
            probe = pl.pallas_call(
                _probe_identity_kernel,
                out_shape=jax.ShapeDtypeStruct((24, 128), jnp.float32),
                grid_spec=pltpu.PrefetchScalarGridSpec(
                    num_scalar_prefetch=0,
                    grid=(3,),                                   # odd grid on purpose
                    in_specs=[pl.BlockSpec((8, 128), lambda i: (i, 0))],
                    out_specs=pl.BlockSpec((8, 128), lambda i: (i, 0)),
                ),
                compiler_params=pltpu.CompilerParams(dimension_semantics=(sem,)),
            )
            x_probe = jnp.arange(24 * 128, dtype=jnp.float32).reshape(24, 128)
            y_probe = jax.block_until_ready(jax.jit(probe)(x_probe))
            if bool(jnp.array_equal(y_probe, x_probe)):
                chosen = sem
        except Exception:
            chosen = pltpu.PARALLEL
    _BATCH_SEMANTICS_CACHE.append(chosen)
    return chosen


# -----------------------------------------------------------------------------
# Cost estimate (advisory hint for the XLA scheduler)
# -----------------------------------------------------------------------------
def _cost_estimate(rows, d_in, d_mid):
    flops = 2 * rows * d_in * d_mid * 2 + 4 * rows * (d_in + d_mid)
    bytes_accessed = 4 * (2 * rows * d_in + 2 * d_in * d_mid + d_in + d_mid)
    return pl.CostEstimate(flops=flops, transcendentals=0,
                           bytes_accessed=bytes_accessed)


# -----------------------------------------------------------------------------
# Forward paths
# -----------------------------------------------------------------------------
def _forward_no_grid(xp, w1, b1, w2, b2):
    """Small/medium batch: everything resident in VMEM, no grid / no pipeline."""
    rows, d_in = xp.shape
    d_mid = w1.shape[1]
    vm = pltpu.MemorySpace.VMEM
    return pl.pallas_call(
        inception_kernel,
        out_shape=jax.ShapeDtypeStruct((rows, d_in), xp.dtype),
        in_specs=[pl.BlockSpec(memory_space=vm)] * 5,
        out_specs=pl.BlockSpec(memory_space=vm),
        compiler_params=pltpu.CompilerParams(vmem_limit_bytes=_VMEM_LIMIT_BYTES),
        cost_estimate=_cost_estimate(rows, d_in, d_mid),
    )(xp, w1, b1, w2, b2)


def _forward_tiled(xp, w1, b1, w2, b2, tp):
    """Large batch: tile the (packed) batch axis, weights/biases resident,
    cdiv grid handles a partial last tile, batch axis split across cores."""
    rows, d_in = xp.shape
    d_mid = w1.shape[1]
    grid = (pl.cdiv(rows, tp),)
    return pl.pallas_call(
        inception_kernel,
        out_shape=jax.ShapeDtypeStruct((rows, d_in), xp.dtype),
        grid_spec=pltpu.PrefetchScalarGridSpec(
            num_scalar_prefetch=0,
            grid=grid,
            in_specs=[
                pl.BlockSpec((tp, d_in), lambda i: (i, 0)),       # x tile
                pl.BlockSpec((d_in, d_mid), lambda i: (0, 0)),    # W1_bd resident
                pl.BlockSpec((1, d_mid), lambda i: (0, 0)),       # b1 resident
                pl.BlockSpec((d_mid, d_in), lambda i: (0, 0)),    # W2_bd resident
                pl.BlockSpec((1, d_in), lambda i: (0, 0)),        # b2 resident
            ],
            out_specs=pl.BlockSpec((tp, d_in), lambda i: (i, 0)),
        ),
        compiler_params=pltpu.CompilerParams(
            dimension_semantics=(_batch_dim_semantics(),),
            vmem_limit_bytes=_VMEM_LIMIT_BYTES,
        ),
        cost_estimate=_cost_estimate(rows, d_in, d_mid),
    )(xp, w1, b1, w2, b2)


def _select_packed_tile(rows):
    if rows <= _NO_GRID_MAX_ROWS:
        return None
    for cand in _TILE_CANDIDATES:        # prefer >= 4 grid steps (both TCs + pipeline)
        if rows >= 4 * cand:
            return cand
    for cand in _TILE_CANDIDATES:        # accept >= 2 grid steps
        if rows >= 2 * cand:
            return cand
    return _TILE_CANDIDATES[-1]


def inception_forward(x, params):
    """x: (B, n_in) f32; params from prepare_inception_params (one-time prep)."""
    w1_bd, b1_bd, w2_bd, b2_bd = params
    B, n_in = x.shape
    d_in = w1_bd.shape[0]            # packed width (= pack * n_in)
    pack = d_in // n_in

    rows = -(-B // pack)             # ceil(B / pack) packed rows
    pad = rows * pack - B
    xp = x if pad == 0 else jnp.pad(x, ((0, pad), (0, 0)))
    xp = xp.reshape(rows, d_in)      # metadata-only when pad == 0 (contiguous f32)

    tp = _select_packed_tile(rows)
    if tp is None:
        op = _forward_no_grid(xp, w1_bd, b1_bd, w2_bd, b2_bd)
    else:
        op = _forward_tiled(xp, w1_bd, b1_bd, w2_bd, b2_bd, tp)

    out = op.reshape(rows * pack, n_in)
    return out if pad == 0 else out[:B]


def reference_forward(x, w1, b1, w2, b2):
    # Pure-JAX reference matching torch semantics exactly.
    h = jnp.maximum(x @ w1.T + b1, 0.0)
    y = h @ w2.T + b2
    return jnp.maximum(y + x, 0.0)


if __name__ == "__main__":
    n_in, n_mid = 32, 64
    key = jax.random.PRNGKey(0)
    kx, k1, k2, k3, k4, kx2, kx3 = jax.random.split(key, 7)

    # torch nn.Linear layout: weight (out_features, in_features), bias (out_features,)
    w1 = jax.random.normal(k1, (n_mid, n_in), dtype=jnp.float32) * 0.1
    b1 = jax.random.normal(k2, (n_mid,), dtype=jnp.float32) * 0.1
    w2 = jax.random.normal(k3, (n_in, n_mid), dtype=jnp.float32) * 0.1
    b2 = jax.random.normal(k4, (n_in,), dtype=jnp.float32) * 0.1

    # One-time parameter preparation (block-diagonal packing, outside hot path).
    params = jax.tree_util.tree_map(jax.block_until_ready,
                                    prepare_inception_params(w1, b1, w2, b2))

    fwd = jax.jit(inception_forward)

    # Small batch: gridless whole-in-VMEM path.
    B = 8
    x = jax.random.normal(kx, (B, n_in), dtype=jnp.float32)
    out = jax.block_until_ready(fwd(x, params))
    ref = reference_forward(x, w1, b1, w2, b2)
    assert out.shape == (B, n_in)
    assert jnp.allclose(out, ref, atol=1e-5, rtol=1e-5)

    # Larger batch: tiled path (packed rows = 4096 -> grid of 4 x 1024-row tiles).
    B2 = 16384
    x2 = jax.random.normal(kx2, (B2, n_in), dtype=jnp.float32)
    out2 = jax.block_until_ready(fwd(x2, params))
    ref2 = reference_forward(x2, w1, b1, w2, b2)
    assert out2.shape == (B2, n_in)
    assert jnp.allclose(out2, ref2, atol=1e-4, rtol=1e-4)

    # Ragged batch: B % 4 != 0 (row pad) and a partial last grid tile.
    B3 = 8210
    x3 = jax.random.normal(kx3, (B3, n_in), dtype=jnp.float32)
    out3 = jax.block_until_ready(fwd(x3, params))
    ref3 = reference_forward(x3, w1, b1, w2, b2)
    assert out3.shape == (B3, n_in)
    assert jnp.allclose(out3, ref3, atol=1e-4, rtol=1e-4)

    print("KERNEL_OK")
</pallas_src>

<mosaic_0001>
module attributes {stable_mosaic.version = 11 : i64} {
  func.func @_probe_identity_kernel(%arg0: i32, %arg1: memref<8x128xf32, #tpu.memory_space<vmem>>, %arg2: memref<8x128xf32, #tpu.memory_space<vmem>>) attributes {dimension_semantics = [#tpu.dimension_semantics<core_parallel>], iteration_bounds = array<i64: 3>, scalar_prefetch = 0 : i64, scratch_operands = 0 : i64, tpu.core_type = #tpu.core_type<tc>, window_params = [{transform_indices = @transform_0, window_bounds = array<i64: 8, 128>}, {transform_indices = @transform_1, window_bounds = array<i64: 8, 128>}]} {
    %c0 = arith.constant 0 : index
    %c0_0 = arith.constant 0 : index
    %0 = vector.load %arg1[%c0, %c0_0] : memref<8x128xf32, #tpu.memory_space<vmem>>, vector<8x128xf32>
    %c0_1 = arith.constant 0 : index
    %c0_2 = arith.constant 0 : index
    %1 = vector.load %arg2[%c0_1, %c0_2] : memref<8x128xf32, #tpu.memory_space<vmem>>, vector<8x128xf32>
    tpu.vector_store %arg2[%c0_1, %c0_2], %0 {strides = array<i32>} : memref<8x128xf32, #tpu.memory_space<vmem>>, vector<8x128xf32>,
    return
  }
  func.func @transform_0(%arg0: i32) -> (i32, i32) {
    %c0_i32 = arith.constant 0 : i32
    %c0_i32_0 = arith.constant 0 : i32
    return %arg0, %c0_i32 : i32, i32
  }
  func.func @transform_1(%arg0: i32) -> (i32, i32) {
    %c0_i32 = arith.constant 0 : i32
    %c0_i32_0 = arith.constant 0 : i32
    return %arg0, %c0_i32 : i32, i32
  }
}

module attributes {stable_mosaic.version = 11 : i64} {
  func.func @inception_kernel(%arg0: memref<2x128xf32, #tpu.memory_space<vmem>>, %arg1: memref<128x256xf32, #tpu.memory_space<vmem>>, %arg2: memref<1x256xf32, #tpu.memory_space<vmem>>, %arg3: memref<256x128xf32, #tpu.memory_space<vmem>>, %arg4: memref<1x128xf32, #tpu.memory_space<vmem>>, %arg5: memref<2x128xf32, #tpu.memory_space<vmem>>) attributes {dimension_semantics = [], scalar_prefetch = 0 : i64, scratch_operands = 0 : i64, tpu.core_type = #tpu.core_type<tc>} {
    %c0 = arith.constant 0 : index
    %c0_0 = arith.constant 0 : index
    %0 = vector.load %arg0[%c0, %c0_0] : memref<2x128xf32, #tpu.memory_space<vmem>>, vector<2x128xf32>
    %c0_1 = arith.constant 0 : index
    %c0_2 = arith.constant 0 : index
    %1 = vector.load %arg1[%c0_1, %c0_2] : memref<128x256xf32, #tpu.memory_space<vmem>>, vector<128x256xf32>
    %cst = arith.constant dense<0.000000e+00> : vector<2x256xf32>
    %2 = tpu.matmul %0, %1, %cst {dimension_numbers = #tpu.dot_dimension_numbers<[1], [0], [0], [1], [0, 0, 1, 1], [], []>} : vector<2x128xf32>, vector<128x256xf32>, vector<2x256xf32> -> vector<2x256xf32>
    %c0_3 = arith.constant 0 : index
    %c0_4 = arith.constant 0 : index
    %3 = vector.load %arg2[%c0_3, %c0_4] : memref<1x256xf32, #tpu.memory_space<vmem>>, vector<1x256xf32>
    %4 = vector.broadcast %3 : vector<1x256xf32> to vector<2x256xf32>
    %5 = arith.addf %2, %4 : vector<2x256xf32>
    %cst_5 = arith.constant 0.000000e+00 : f32
    %6 = vector.broadcast %cst_5 : f32 to vector<2x256xf32>
    %7 = arith.maximumf %5, %6 : vector<2x256xf32>
    %c0_6 = arith.constant 0 : index
    %c0_7 = arith.constant 0 : index
    %8 = vector.load %arg3[%c0_6, %c0_7] : memref<256x128xf32, #tpu.memory_space<vmem>>, vector<256x128xf32>
    %cst_8 = arith.constant dense<0.000000e+00> : vector<2x128xf32>
    %9 = tpu.matmul %7, %8, %cst_8 {dimension_numbers = #tpu.dot_dimension_numbers<[1], [0], [0], [1], [0, 0, 1, 1], [], []>} : vector<2x256xf32>, vector<256x128xf32>, vector<2x128xf32> -> vector<2x128xf32>
    %c0_9 = arith.constant 0 : index
    %c0_10 = arith.constant 0 : index
    %10 = vector.load %arg4[%c0_9, %c0_10] : memref<1x128xf32, #tpu.memory_space<vmem>>, vector<1x128xf32>
    %11 = vector.broadcast %10 : vector<1x128xf32> to vector<2x128xf32>
    %12 = arith.addf %9, %11 : vector<2x128xf32>
    %13 = arith.addf %12, %0 : vector<2x128xf32>
    %cst_11 = arith.constant 0.000000e+00 : f32
    %14 = vector.broadcast %cst_11 : f32 to vector<2x128xf32>
    %15 = arith.maximumf %13, %14 : vector<2x128xf32>
    %c0_12 = arith.constant 0 : index
    %c0_13 = arith.constant 0 : index
    %16 = vector.load %arg5[%c0_12, %c0_13] : memref<2x128xf32, #tpu.memory_space<vmem>>, vector<2x128xf32>
    tpu.vector_store %arg5[%c0_12, %c0_13], %15 {strides = array<i32>} : memref<2x128xf32, #tpu.memory_space<vmem>>, vector<2x128xf32>,
    return
  }
}

</mosaic_0001>

<llo_original>
// kernel: inception_forward.1
$region0: #{inception_forward.1}
  #allocation0 [shape = 'u32[]', space=smem, size = 0x4, offset = 0x4, fixed_abs, tag = 'smem constant byte address 0x4 - core index']
  #allocation1 [shape = 'u32[144,128]{1,0:T(1,128)}', space=vmem, size = 0x12000, scoped, tag = 'internal scratch']
  %s0 = inlined_call_operand.vmem [shape: f32[2,128], index: 0, kind: input, shape index: {}]
  %s1 = inlined_call_operand.hbm [shape: f32[128,256], index: 1, kind: input, shape index: {}]
  %s2 = inlined_call_operand.vmem [shape: f32[1,256], index: 2, kind: input, shape index: {}]
  %s3 = inlined_call_operand.hbm [shape: f32[256,128], index: 3, kind: input, shape index: {}]
  %s4 = inlined_call_operand.vmem [shape: f32[1,128], index: 4, kind: input, shape index: {}]
  %s5 = inlined_call_operand.vmem [shape: f32[2,128], index: 5, kind: output, shape index: {}]
  %s6 = sld [smem:[#allocation0]]
  $region38: #{inception_forward.1} parent=0
    _
  %s8 = ssub.s32 1, %s6
  %s9 = scalar_select 0, %s8, %s6
  $region1: #{inception_forward.1} parent=0
    #allocation2 [shape = 'u8[131072]{0}', space=vmem, size = 0x20000, scoped, tag = 'input window, operand 1, single buffered']
    #allocation3 [shape = 's32[1]{0}', space=sflag, size = 0x4, scoped, tag = 'scoped memory for inception_forward.1']
    #allocation4 [shape = 'u8[131072]{0}', space=vmem, size = 0x20000, scoped, tag = 'input window, operand 3, single buffered']
    #allocation5 [shape = 's32[1]{0}', space=sflag, size = 0x4, scoped, tag = 'scoped memory for inception_forward.1']
    %10 = vsyncpa [#allocation3], 0
    %11 = vsyncpa [#allocation5], 0
    // Predicated region
    $region2: #{inception_forward.1} parent=1 // pred_check
      _
    $region3: #{inception_forward.1} parent=1 // pred_check_branch
      %13 = sbr.rel (0) target = $region5
    $region4: #{inception_forward.1} parent=1 // pred_region
      _
    $region5: #{inception_forward.1} parent=1 // pred_fallthru
      _
    // Predicated region
    $region6: #{inception_forward.1} parent=1 // pred_check
      _
    $region7: #{inception_forward.1} parent=1 // pred_check_branch
      %15 = sbr.rel (0) target = $region9
    $region8: #{inception_forward.1} parent=1 // pred_region
      %s17 = ssub.s32 4096, 4096
      %18 = vsyncadd [#allocation3], %s17
      %s19 = sshll.u32 [#allocation2], 4
      %s20 = int_to_ptr.vmem [resolvable:$true] %s19
      %25 = dma.hbm_to_vmem [thread:$0]  %s1, 4096, %s20, [#allocation3], 256, 256, 16
    $region9: #{inception_forward.1} parent=1 // pred_fallthru
      _
    // Predicated region
    $region10: #{inception_forward.1} parent=1 // pred_check
      _
    $region11: #{inception_forward.1} parent=1 // pred_check_branch
      %27 = sbr.rel (0) target = $region13
    $region12: #{inception_forward.1} parent=1 // pred_region
      _
    $region13: #{inception_forward.1} parent=1 // pred_fallthru
      _
    // Predicated region
    $region14: #{inception_forward.1} parent=1 // pred_check
      _
    $region15: #{inception_forward.1} parent=1 // pred_check_branch
      %29 = sbr.rel (0) target = $region17
    $region16: #{inception_forward.1} parent=1 // pred_region
      %s31 = ssub.s32 4096, 4096
      %32 = vsyncadd [#allocation5], %s31
      %s33 = sshll.u32 [#allocation4], 4
      %s34 = int_to_ptr.vmem [resolvable:$true] %s33
      %39 = dma.hbm_to_vmem [thread:$0]  %s3, 4096, %s34, [#allocation5], 128, 128, 8
    $region17: #{inception_forward.1} parent=1 // pred_fallthru
      _
    // Predicated region
    $region18: #{inception_forward.1} parent=1 // pred_check
      _
    $region19: #{inception_forward.1} parent=1 // pred_check_branch
      %41 = sbr.rel (0) target = $region21
    $region20: #{inception_forward.1} parent=1 // pred_region
      _
    $region21: #{inception_forward.1} parent=1 // pred_fallthru
      _
    // Predicated region
    $region22: #{inception_forward.1} parent=1 // pred_check
      _
    $region23: #{inception_forward.1} parent=1 // pred_check_branch
      %43 = sbr.rel (0) target = $region25
    $region24: #{inception_forward.1} parent=1 // pred_region
      %44 = dma.done [#allocation3], 4096
    $region25: #{inception_forward.1} parent=1 // pred_fallthru
      _
    // Predicated region
    $region26: #{inception_forward.1} parent=1 // pred_check
      _
    $region27: #{inception_forward.1} parent=1 // pred_check_branch
      %46 = sbr.rel (0) target = $region29
    $region28: #{inception_forward.1} parent=1 // pred_region
      %47 = dma.done [#allocation5], 4096
    $region29: #{inception_forward.1} parent=1 // pred_fallthru
      _
    %v48 = vld [vmem:[%s0] sm:$0x3]
    %v49 = vld [vmem:[#allocation2] sm:$0xff]
    %v50 = vld [vmem:[#allocation2 + $0x8] sm:$0xff]
    %v51 = vld [vmem:[#allocation2 + $0x10] sm:$0xff]
    %v52 = vld [vmem:[#allocation2 + $0x18] sm:$0xff]
    %v53 = vld [vmem:[#allocation2 + $0x20] sm:$0xff]
    %v54 = vld [vmem:[#allocation2 + $0x28] sm:$0xff]
    %v55 = vld [vmem:[#allocation2 + $0x30] sm:$0xff]
    %v56 = vld [vmem:[#allocation2 + $0x38] sm:$0xff]
    %v57 = vld [vmem:[#allocation2 + $0x40] sm:$0xff]
    %v58 = vld [vmem:[#allocation2 + $0x48] sm:$0xff]
    %v59 = vld [vmem:[#allocation2 + $0x50] sm:$0xff]
    %v60 = vld [vmem:[#allocation2 + $0x58] sm:$0xff]
    %v61 = vld [vmem:[#allocation2 + $0x60] sm:$0xff]
    %v62 = vld [vmem:[#allocation2 + $0x68] sm:$0xff]
    %v63 = vld [vmem:[#allocation2 + $0x70] sm:$0xff]
    %v64 = vld [vmem:[#allocation2 + $0x78] sm:$0xff]
    %v65 = vld [vmem:[#allocation2 + $0x80] sm:$0xff]
    %v66 = vld [vmem:[#allocation2 + $0x88] sm:$0xff]
    %v67 = vld [vmem:[#allocation2 + $0x90] sm:$0xff]
    %v68 = vld [vmem:[#allocation2 + $0x98] sm:$0xff]
    %v69 = vld [vmem:[#allocation2 + $0xa0] sm:$0xff]
    %v70 = vld [vmem:[#allocation2 + $0xa8] sm:$0xff]
    %v71 = vld [vmem:[#allocation2 + $0xb0] sm:$0xff]
    %v72 = vld [vmem:[#allocation2 + $0xb8] sm:$0xff]
    %v73 = vld [vmem:[#allocation2 + $0xc0] sm:$0xff]
    %v74 = vld [vmem:[#allocation2 + $0xc8] sm:$0xff]
    %v75 = vld [vmem:[#allocation2 + $0xd0] sm:$0xff]
    %v76 = vld [vmem:[#allocation2 + $0xd8] sm:$0xff]
    %v77 = vld [vmem:[#allocation2 + $0xe0] sm:$0xff]
    %v78 = vld [vmem:[#allocation2 + $0xe8] sm:$0xff]
    %v79 = vld [vmem:[#allocation2 + $0xf0] sm:$0xff]
    %v80 = vld [vmem:[#allocation2 + $0xf8] sm:$0xff]
    %v81 = vld [vmem:[%s2] sm:$0x3]
    %v83 = vlaneseq
    %v84 = vshrl.u32 %v83, 7
    %v85 = vsub.s32 0, %v84
    %v86 = vrot.slane %v81, %v85
    %v87 = vlaneseq
    %v88 = vshrl.u32 %v87, 7
    %v89 = vsub.s32 1, %v88
    %v90 = vrot.slane %v81, %v89
    %93 = vmatprep.subr.mxu0 %v50
    %94 = vmatpush1.msra.mxu0 %v49
    %95 = vmatprep.subr.mxu0 %v52
    %96 = vmatpush1.msra.mxu0 %v51
    %97 = vmatprep.subr.mxu0 %v54
    %98 = vmatpush1.msra.mxu0 %v53
    %99 = vmatprep.subr.mxu0 %v56
    %100 = vmatpush1.msra.mxu0 %v55
    %101 = vmatprep.subr.mxu0 %v58
    %102 = vmatpush1.msra.mxu0 %v57
    %103 = vmatprep.subr.mxu0 %v60
    %104 = vmatpush1.msra.mxu0 %v59
    %105 = vmatprep.subr.mxu0 %v62
    %106 = vmatpush1.msra.mxu0 %v61
    %107 = vmatprep.subr.mxu0 %v64
    %108 = vmatpush1.msra.mxu0 %v63
    %109 = vmatprep.subr.mxu0 %v66
    %110 = vmatpush1.msra.mxu0 %v65
    %111 = vmatprep.subr.mxu0 %v68
    %112 = vmatpush1.msra.mxu0 %v67
    %113 = vmatprep.subr.mxu0 %v70
    %114 = vmatpush1.msra.mxu0 %v69
    %115 = vmatprep.subr.mxu0 %v72
    %116 = vmatpush1.msra.mxu0 %v71
    %117 = vmatprep.subr.mxu0 %v74
    %118 = vmatpush1.msra.mxu0 %v73
    %119 = vmatprep.subr.mxu0 %v76
    %120 = vmatpush1.msra.mxu0 %v75
    %121 = vmatprep.subr.mxu0 %v78
    %122 = vmatpush1.msra.mxu0 %v77
    %123 = vmatprep.subr.mxu0 %v80
    %124 = vmatpush1.msra.mxu0 %v79
    %125 = vmatprep.subr.mxu0 0.0
    %126 = vmatpush1.msra.mxu0 0.0
    %127 = vmatprep.subr.mxu0 0.0
    %128 = vmatpush1.msra.mxu0 0.0
    %129 = vmatprep.subr.mxu0 0.0
    %130 = vmatpush1.msra.mxu0 0.0
    %131 = vmatprep.subr.mxu0 0.0
    %132 = vmatpush1.msra.mxu0 0.0
    %133 = vmatprep.subr.mxu0 0.0
    %134 = vmatpush1.msra.mxu0 0.0
    %135 = vmatprep.subr.mxu0 0.0
    %136 = vmatpush1.msra.mxu0 0.0
    %137 = vmatprep.subr.mxu0 0.0
    %138 = vmatpush1.msra.mxu0 0.0
    %139 = vmatprep.subr.mxu0 0.0
    %140 = vmatpush1.msra.mxu0 0.0
    %141 = vmatprep.subr.mxu0 0.0
    %142 = vmatpush1.msra.mxu0 0.0
    %143 = vmatprep.subr.mxu0 0.0
    %144 = vmatpush1.msra.mxu0 0.0
    %145 = vmatprep.subr.mxu0 0.0
    %146 = vmatpush1.msra.mxu0 0.0
    %147 = vmatprep.subr.mxu0 0.0
    %148 = vmatpush1.msra.mxu0 0.0
    %149 = vmatprep.subr.mxu0 0.0
    %150 = vmatpush1.msra.mxu0 0.0
    %151 = vmatprep.subr.mxu0 0.0
    %152 = vmatpush1.msra.mxu0 0.0
    %153 = vmatprep.subr.mxu0 0.0
    %154 = vmatpush1.msra.mxu0 0.0
    %155 = vmatprep.subr.mxu0 0.0
    %156 = vmatpush1.msra.mxu0 0.0
    %157 = vmatprep.mubr.f32.mxu0 0.0
    %158 = vmatmul.mubr.f32.gmra.mrb[0].mxu0 %v48
    %v159 = vpop.f32.mrb[0].mxu0
    %v160 = vadd.f32 %v86, %v159
    %v161 = vpop.f32.mrb[0].mxu0
    %v162 = vadd.f32 %v90, %v161
    %163 = vdwg.mxu0
    %v164 = vmax.f32 %v160, 0.0
    %v165 = vmax.f32 %v162, 0.0
    %v166 = vld [vmem:[#allocation4] sm:$0xff]
    %v167 = vld [vmem:[#allocation4 + $0x8] sm:$0xff]
    %v168 = vld [vmem:[#allocation4 + $0x10] sm:$0xff]
    %v169 = vld [vmem:[#allocation4 + $0x18] sm:$0xff]
    %v170 = vld [vmem:[#allocation4 + $0x20] sm:$0xff]
    %v171 = vld [vmem:[#allocation4 + $0x28] sm:$0xff]
    %v172 = vld [vmem:[#allocation4 + $0x30] sm:$0xff]
    %v173 = vld [vmem:[#allocation4 + $0x38] sm:$0xff]
    %v174 = vld [vmem:[#allocation4 + $0x40] sm:$0xff]
    %v175 = vld [vmem:[#allocation4 + $0x48] sm:$0xff]
    %v176 = vld [vmem:[#allocation4 + $0x50] sm:$0xff]
    %v177 = vld [vmem:[#allocation4 + $0x58] sm:$0xff]
    %v178 = vld [vmem:[#allocation4 + $0x60] sm:$0xff]
    %v179 = vld [vmem:[#allocation4 + $0x68] sm:$0xff]
    %v180 = vld [vmem:[#allocation4 + $0x70] sm:$0xff]
    %v181 = vld [vmem:[#allocation4 + $0x78] sm:$0xff]
    %v182 = vld [vmem:[#allocation4 + $0x80] sm:$0xff]
    %v183 = vld [vmem:[#allocation4 + $0x88] sm:$0xff]
    %v184 = vld [vmem:[#allocation4 + $0x90] sm:$0xff]
    %v185 = vld [vmem:[#allocation4 + $0x98] sm:$0xff]
    %v186 = vld [vmem:[#allocation4 + $0xa0] sm:$0xff]
    %v187 = vld [vmem:[#allocation4 + $0xa8] sm:$0xff]
    %v188 = vld [vmem:[#allocation4 + $0xb0] sm:$0xff]
    %v189 = vld [vmem:[#allocation4 + $0xb8] sm:$0xff]
    %v190 = vld [vmem:[#allocation4 + $0xc0] sm:$0xff]
    %v191 = vld [vmem:[#allocation4 + $0xc8] sm:$0xff]
    %v192 = vld [vmem:[#allocation4 + $0xd0] sm:$0xff]
    %v193 = vld [vmem:[#allocation4 + $0xd8] sm:$0xff]
    %v194 = vld [vmem:[#allocation4 + $0xe0] sm:$0xff]
    %v195 = vld [vmem:[#allocation4 + $0xe8] sm:$0xff]
    %v196 = vld [vmem:[#allocation4 + $0xf0] sm:$0xff]
    %v197 = vld [vmem:[#allocation4 + $0xf8] sm:$0xff]
    %v198 = vld [vmem:[%s4] sm:$0x1]
    %v200 = vlaneseq
    %v201 = vshrl.u32 %v200, 7
    %v202 = vsub.s32 0, %v201
    %v203 = vrot.slane %v198, %v202
    %205 = vmatprep.subr.mxu0 0.0
    %206 = vmatpush1.msra.mxu0 %v166
    %207 = vmatprep.subr.mxu0 0.0
    %208 = vmatpush1.msra.mxu0 %v167
    %209 = vmatprep.subr.mxu0 0.0
    %210 = vmatpush1.msra.mxu0 %v168
    %211 = vmatprep.subr.mxu0 0.0
    %212 = vmatpush1.msra.mxu0 %v169
    %213 = vmatprep.subr.mxu0 0.0
    %214 = vmatpush1.msra.mxu0 %v170
    %215 = vmatprep.subr.mxu0 0.0
    %216 = vmatpush1.msra.mxu0 %v171
    %217 = vmatprep.subr.mxu0 0.0
    %218 = vmatpush1.msra.mxu0 %v172
    %219 = vmatprep.subr.mxu0 0.0
    %220 = vmatpush1.msra.mxu0 %v173
    %221 = vmatprep.subr.mxu0 0.0
    %222 = vmatpush1.msra.mxu0 %v174
    %223 = vmatprep.subr.mxu0 0.0
    %224 = vmatpush1.msra.mxu0 %v175
    %225 = vmatprep.subr.mxu0 0.0
    %226 = vmatpush1.msra.mxu0 %v176
    %227 = vmatprep.subr.mxu0 0.0
    %228 = vmatpush1.msra.mxu0 %v177
    %229 = vmatprep.subr.mxu0 0.0
    %230 = vmatpush1.msra.mxu0 %v178
    %231 = vmatprep.subr.mxu0 0.0
    %232 = vmatpush1.msra.mxu0 %v179
    %233 = vmatprep.subr.mxu0 0.0
    %234 = vmatpush1.msra.mxu0 %v180
    %235 = vmatprep.subr.mxu0 0.0
    %236 = vmatpush1.msra.mxu0 %v181
    %237 = vmatprep.subr.mxu0 0.0
    %238 = vmatpush1.msra.mxu0 %v182
    %239 = vmatprep.subr.mxu0 0.0
    %240 = vmatpush1.msra.mxu0 %v183
    %241 = vmatprep.subr.mxu0 0.0
    %242 = vmatpush1.msra.mxu0 %v184
    %243 = vmatprep.subr.mxu0 0.0
    %244 = vmatpush1.msra.mxu0 %v185
    %245 = vmatprep.subr.mxu0 0.0
    %246 = vmatpush1.msra.mxu0 %v186
    %247 = vmatprep.subr.mxu0 0.0
    %248 = vmatpush1.msra.mxu0 %v187
    %249 = vmatprep.subr.mxu0 0.0
    %250 = vmatpush1.msra.mxu0 %v188
    %251 = vmatprep.subr.mxu0 0.0
    %252 = vmatpush1.msra.mxu0 %v189
    %253 = vmatprep.subr.mxu0 0.0
    %254 = vmatpush1.msra.mxu0 %v190
    %255 = vmatprep.subr.mxu0 0.0
    %256 = vmatpush1.msra.mxu0 %v191
    %257 = vmatprep.subr.mxu0 0.0
    %258 = vmatpush1.msra.mxu0 %v192
    %259 = vmatprep.subr.mxu0 0.0
    %260 = vmatpush1.msra.mxu0 %v193
    %261 = vmatprep.subr.mxu0 0.0
    %262 = vmatpush1.msra.mxu0 %v194
    %263 = vmatprep.subr.mxu0 0.0
    %264 = vmatpush1.msra.mxu0 %v195
    %265 = vmatprep.subr.mxu0 0.0
    %266 = vmatpush1.msra.mxu0 %v196
    %267 = vmatprep.subr.mxu0 0.0
    %268 = vmatpush1.msra.mxu0 %v197
    %269 = vmatprep.mubr.f32.mxu0 %v165
    %270 = vmatmul.mubr.f32.gmra.mrb[0].mxu0 %v164
    %v271 = vpop.f32.mrb[0].mxu0
    %v272 = vadd.f32 %v203, %v271
    %v273 = vpop.f32.mrb[0].mxu0
    %274 = vdwg.mxu0
    %v275 = vadd.f32 %v272, %v48
    %v276 = vmax.f32 %v275, 0.0
    %277 = vst [vmem:[%s5] sm:$0x3] %v276
    // Predicated region
    $region30: #{inception_forward.1} parent=1 // pred_check
      _
    $region31: #{inception_forward.1} parent=1 // pred_check_branch
      %279 = sbr.rel (0) target = $region33
    $region32: #{inception_forward.1} parent=1 // pred_region
      _
    $region33: #{inception_forward.1} parent=1 // pred_fallthru
      _
    // Predicated region
    $region34: #{inception_forward.1} parent=1 // pred_check
      _
    $region35: #{inception_forward.1} parent=1 // pred_check_branch
      %281 = sbr.rel (0) target = $region37
    $region36: #{inception_forward.1} parent=1 // pred_region
      _
    $region37: #{inception_forward.1} parent=1 // pred_fallthru
      _
    %282 = vsyncpa [#allocation3], 1
    %283 = vsyncpa [#allocation5], 1

</llo_original>
